<compile_context>
chip_gen: v5e
topology: v5e:2x2
jax: 0.10.0
libtpu: 0.0.40
codegen_flags: <defaults>
</compile_context>

<pallas_src>
import jax
import jax.numpy as jnp
from jax.experimental import pallas as pl
from jax.experimental.pallas import tpu as pltpu

_EPS = 1e-12
# dot_general dims for "A @ B^T": contract dim 1 of both operands, no batch.
_NT = (((1,), (1,)), ((), ()))


# -----------------------------------------------------------------------------
# Stage 1 (runs once): per-node mass
#   s[0, j] = sum_f normalize(relu(h @ W^T + b), p=1, dim=1)[j, f]
# -----------------------------------------------------------------------------
def _node_mass_kernel(h_ref, w_ref, b_ref, s_ref):
    z = jnp.dot(h_ref[...], w_ref[...], preferred_element_type=jnp.float32)
    z = jnp.maximum(z + b_ref[...], 0.0)                      # (N, F), >= 0
    # Lane-dense per-row L1 norm (z >= 0 -> no abs needed):
    #   l1[0, j] = sum_f z[j, f] == ones(1, F) @ z^T   (MXU, transposed-RHS form)
    ones_f = jnp.ones((1, z.shape[1]), jnp.float32)
    l1 = jax.lax.dot_general(ones_f, z, _NT, preferred_element_type=jnp.float32)
    # Row-sum of the L1-normalized row collapses to l1 / max(l1, eps).
    # Exact divide (once, on a (1, N) vector): avoids approx-recip 0*inf NaN.
    s_ref[...] = l1 / jnp.maximum(l1, _EPS)


# -----------------------------------------------------------------------------
# Stage 2 (HBM-bound): graph aggregation  o[0, i] = sum_j A[i, j] * s[0, j]
# A streamed in bf16 row tiles, s VMEM-resident, f32 accumulation.
# -----------------------------------------------------------------------------
def _aggregate_kernel(s_ref, a_ref, o_ref):
    o_ref[...] = jax.lax.dot_general(
        s_ref[...], a_ref[...], _NT, preferred_element_type=jnp.float32)


def _vmem_capacity_bytes():
    try:
        return int(pltpu.get_tpu_info().vmem_capacity_bytes)
    except Exception:
        return 64 << 20  # most conservative per-core value (v7x)


def _plan_tiles(n, tile_n=None):
    """Choose the A row-tile and the (possibly padded) problem size."""
    vmem = _vmem_capacity_bytes()
    # Budget for the double-buffered bf16 A tile; keep ~40% of VMEM free for
    # the resident s row, the output tile, and compiler-internal scratch.
    budget = int(vmem * 0.6)
    if tile_n is None:
        fit = budget // max(2 * 2 * n, 1)       # 2 buffers * 2 B/elem * n cols
        if fit >= n:
            tile_n = n                          # whole A fits -> single step
        else:
            tile_n = max(128, (fit // 128) * 128)
    if tile_n >= n:
        return n, n, vmem                       # full-array block, no padding
    # Tiled path: sub-array blocks must be (8,128)-aligned and the grid must
    # cover the (padded) array exactly.
    assert tile_n % 128 == 0, "row tiles smaller than N must be multiples of 128"
    n_pad = ((n + tile_n - 1) // tile_n) * tile_n
    return tile_n, n_pad, vmem


def importance_net_forward(h, A, w_t, b, *, tile_n=None):
    """h: (N, F) f32, A: (N, N) f32, w_t: (F, F) == W.T, b: (F,). Returns (N,) f32."""
    N, F = h.shape
    assert A.shape == (N, N)

    # ---- Stage 1: per-node mass (tiny, runs once) ---------------------------
    # TODO(synk): for graphs where (N, F) h no longer fits comfortably in VMEM
    # (N >~ 1e5 at F=32), tile this stage over node rows as well.
    s = pl.pallas_call(
        _node_mass_kernel,
        out_shape=jax.ShapeDtypeStruct((1, N), jnp.float32),
    )(h, w_t, b.reshape(1, F))

    # ---- Stage 2: stream A ---------------------------------------------------
    tile_n, n_pad, vmem_cap = _plan_tiles(N, tile_n)
    pad = n_pad - N

    # bf16 streaming of A (one-time wrapper cast); f32 accumulation in-kernel.
    a_bf = A.astype(jnp.bfloat16)
    s_bf = s.astype(jnp.bfloat16)
    if pad:
        # Padded A columns multiply a zero s entry; padded rows sliced off below.
        a_bf = jnp.pad(a_bf, ((0, pad), (0, pad)))
        s_bf = jnp.pad(s_bf, ((0, 0), (0, pad)))

    grid = (n_pad // tile_n,)

    # VMEM accounting with double buffers counted for every BlockSpec input.
    est_bytes = (2 * tile_n * n_pad * 2        # A tile, 2 buffers, bf16
                 + 2 * n_pad * 2               # s row, 2 buffers, bf16
                 + 2 * tile_n * 4              # output tile, 2 buffers, f32
                 + (2 << 20))                  # compiler scratch headroom
    cp_kwargs = dict(dimension_semantics=("parallel",))
    # Raise the scoped VMEM limit only when the smallest default (v5e: 16 MiB)
    # could be exceeded; never request more than ~90% of physical VMEM.
    if est_bytes > (14 << 20):
        cp_kwargs["vmem_limit_bytes"] = min(int(est_bytes * 3 // 2),
                                            int(vmem_cap * 0.9))
    # TODO(synk): on v7x, use pltpu.CORE_PARALLEL (or pl.core_map over the
    # 2-TensorCore mesh) on this axis so both cores stream disjoint halves of A.

    out = pl.pallas_call(
        _aggregate_kernel,
        out_shape=jax.ShapeDtypeStruct((1, n_pad), jnp.float32),
        grid_spec=pltpu.PrefetchScalarGridSpec(
            num_scalar_prefetch=0,
            grid=grid,
            in_specs=[
                pl.BlockSpec((1, n_pad), lambda i: (0, 0)),       # s: resident
                pl.BlockSpec((tile_n, n_pad), lambda i: (i, 0)),  # A: streamed
            ],
            out_specs=pl.BlockSpec((1, tile_n), lambda i: (0, i)),  # lane-dense
        ),
        compiler_params=pltpu.CompilerParams(**cp_kwargs),
    )(s_bf, a_bf)
    return out[0, :N]


def _reference(h, A, w_t, b):
    z = jnp.maximum(h @ w_t + b, 0.0)
    l1 = jnp.sum(jnp.abs(z), axis=1, keepdims=True)
    z = z / jnp.maximum(l1, _EPS)
    return jnp.sum(A @ z, axis=1)


def _make_inputs(key, num_nodes, feature_dim):
    k_h, k_a, k_w, k_b = jax.random.split(key, 4)
    h = jax.random.normal(k_h, (num_nodes, feature_dim), dtype=jnp.float32)
    A = jax.random.uniform(k_a, (num_nodes, num_nodes), dtype=jnp.float32)
    bound = 1.0 / (feature_dim ** 0.5)          # nn.Linear default init range
    W = jax.random.uniform(k_w, (feature_dim, feature_dim),
                           minval=-bound, maxval=bound, dtype=jnp.float32)
    b = jax.random.uniform(k_b, (feature_dim,),
                           minval=-bound, maxval=bound, dtype=jnp.float32)
    return h, A, W.T, b


if __name__ == "__main__":
    key = jax.random.PRNGKey(0)

    # Case 1: module-sized problem (N=8 nodes, F=32 features): single grid step.
    h, A, w_t, b = _make_inputs(jax.random.fold_in(key, 0), 8, 32)
    out = importance_net_forward(h, A, w_t, b)
    jax.block_until_ready(out)
    ref = _reference(h, A, w_t, b)
    assert out.shape == (8,)
    assert jnp.allclose(out, ref, rtol=5e-3, atol=1e-3), "case 1 mismatch"

    # Case 2: tiled A-streaming path (N=256, two 128-row tiles, bf16 A).
    h, A, w_t, b = _make_inputs(jax.random.fold_in(key, 1), 256, 32)
    out = importance_net_forward(h, A, w_t, b, tile_n=128)
    jax.block_until_ready(out)
    ref = _reference(h, A, w_t, b)
    assert out.shape == (256,)
    assert jnp.allclose(out, ref, rtol=5e-3, atol=1e-2), "case 2 mismatch"

    # Case 3: N not a multiple of the tile -> exercises the zero-padding path.
    h, A, w_t, b = _make_inputs(jax.random.fold_in(key, 2), 200, 32)
    out = importance_net_forward(h, A, w_t, b, tile_n=128)
    jax.block_until_ready(out)
    ref = _reference(h, A, w_t, b)
    assert out.shape == (200,)
    assert jnp.allclose(out, ref, rtol=5e-3, atol=1e-2), "case 3 mismatch"

    print("KERNEL_OK")
</pallas_src>

<mosaic_0001>
module attributes {stable_mosaic.version = 11 : i64} {
  func.func @_node_mass_kernel(%arg0: memref<8x32xf32, #tpu.memory_space<vmem>>, %arg1: memref<32x32xf32, #tpu.memory_space<vmem>>, %arg2: memref<1x32xf32, #tpu.memory_space<vmem>>, %arg3: memref<1x8xf32, #tpu.memory_space<vmem>>) attributes {dimension_semantics = [], scalar_prefetch = 0 : i64, scratch_operands = 0 : i64, tpu.core_type = #tpu.core_type<tc>} {
    %c0 = arith.constant 0 : index
    %c0_0 = arith.constant 0 : index
    %0 = vector.load %arg0[%c0, %c0_0] : memref<8x32xf32, #tpu.memory_space<vmem>>, vector<8x32xf32>
    %c0_1 = arith.constant 0 : index
    %c0_2 = arith.constant 0 : index
    %1 = vector.load %arg1[%c0_1, %c0_2] : memref<32x32xf32, #tpu.memory_space<vmem>>, vector<32x32xf32>
    %cst = arith.constant dense<0.000000e+00> : vector<8x32xf32>
    %2 = tpu.matmul %0, %1, %cst {dimension_numbers = #tpu.dot_dimension_numbers<[1], [0], [0], [1], [0, 0, 1, 1], [], []>} : vector<8x32xf32>, vector<32x32xf32>, vector<8x32xf32> -> vector<8x32xf32>
    %c0_3 = arith.constant 0 : index
    %c0_4 = arith.constant 0 : index
    %3 = vector.load %arg2[%c0_3, %c0_4] : memref<1x32xf32, #tpu.memory_space<vmem>>, vector<1x32xf32>
    %4 = vector.broadcast %3 : vector<1x32xf32> to vector<8x32xf32>
    %5 = arith.addf %2, %4 : vector<8x32xf32>
    %cst_5 = arith.constant 0.000000e+00 : f32
    %6 = vector.broadcast %cst_5 : f32 to vector<8x32xf32>
    %7 = arith.maximumf %5, %6 : vector<8x32xf32>
    %cst_6 = arith.constant 1.000000e+00 : f32
    %8 = vector.broadcast %cst_6 : f32 to vector<1x32xf32>
    %cst_7 = arith.constant dense<0.000000e+00> : vector<1x8xf32>
    %9 = tpu.matmul %8, %7, %cst_7 {dimension_numbers = #tpu.dot_dimension_numbers<[1], [1], [0], [0], [0, 0, 1, 0], [], []>} : vector<1x32xf32>, vector<8x32xf32>, vector<1x8xf32> -> vector<1x8xf32>
    %cst_8 = arith.constant 9.99999996E-13 : f32
    %10 = vector.broadcast %cst_8 : f32 to vector<1x8xf32>
    %11 = arith.maximumf %9, %10 : vector<1x8xf32>
    %12 = arith.divf %9, %11 : vector<1x8xf32>
    %c0_9 = arith.constant 0 : index
    %c0_10 = arith.constant 0 : index
    %13 = vector.load %arg3[%c0_9, %c0_10] : memref<1x8xf32, #tpu.memory_space<vmem>>, vector<1x8xf32>
    tpu.vector_store %arg3[%c0_9, %c0_10], %12 {strides = array<i32>} : memref<1x8xf32, #tpu.memory_space<vmem>>, vector<1x8xf32>,
    return
  }
}

</mosaic_0001>

<llo_original>
// kernel: tpu_custom_call.1
$region0: #{tpu_custom_call.1}
  #allocation0 [shape = 'u32[]', space=smem, size = 0x4, offset = 0x4, fixed_abs, tag = 'smem constant byte address 0x4 - core index']
  #allocation1 [shape = 'u32[72,128]{1,0:T(1,128)}', space=vmem, size = 0x9000, scoped, tag = 'internal scratch']
  %s0 = inlined_call_operand.hbm [shape: f32[8,32], index: 0, kind: input, shape index: {}]
  %s1 = inlined_call_operand.hbm [shape: f32[32,32], index: 1, kind: input, shape index: {}]
  %s2 = inlined_call_operand.vmem [shape: f32[1,32], index: 2, kind: input, shape index: {}]
  %s3 = inlined_call_operand.hbm [shape: f32[1,8], index: 3, kind: output, shape index: {}]
  %s4 = sld [smem:[#allocation0]]
  $region30: #{tpu_custom_call.1} parent=0
    _
  %s6 = ssub.s32 1, %s4
  %s7 = scalar_select 0, %s6, %s4
  $region1: #{tpu_custom_call.1} parent=0
    #allocation2 [shape = 'u8[4096]{0}', space=vmem, size = 0x1000, scoped, tag = 'input window, operand 0, single buffered']
    #allocation3 [shape = 's32[1]{0}', space=sflag, size = 0x4, scoped, tag = 'scoped memory for tpu_custom_call.1']
    #allocation4 [shape = 's32[1]{0}', space=sflag, size = 0x4, scoped, tag = 'scoped memory for tpu_custom_call.1']
    #allocation5 [shape = 'u8[16384]{0}', space=vmem, size = 0x4000, scoped, tag = 'input window, operand 1, single buffered']
    #allocation6 [shape = 's32[1]{0}', space=sflag, size = 0x4, scoped, tag = 'scoped memory for tpu_custom_call.1']
    #allocation7 [shape = 'u8[512]{0}', space=vmem, size = 0x400, scoped, tag = 'output window, operand 0, single buffered']
    %8 = vsyncpa [#allocation3], 0
    %9 = vsyncpa [#allocation6], 0
    %10 = vsyncpa [#allocation4], 0
    // Predicated region
    $region2: #{tpu_custom_call.1} parent=1 // pred_check
      _
    $region3: #{tpu_custom_call.1} parent=1 // pred_check_branch
      %12 = sbr.rel (0) target = $region5
    $region4: #{tpu_custom_call.1} parent=1 // pred_region
      %14 = vsyncadd [#allocation3], 0
      %s16 = sshll.u32 %s0, 4
      %s17 = int_to_ptr.hbm [resolvable:$true] %s16
      %s18 = sshll.u32 [#allocation2], 4
      %s19 = int_to_ptr.vmem [resolvable:$true] %s18
      %21 = dma.hbm_to_vmem [thread:$0]  %s17, 128, %s19, [#allocation3]
    $region5: #{tpu_custom_call.1} parent=1 // pred_fallthru
      _
    // Predicated region
    $region6: #{tpu_custom_call.1} parent=1 // pred_check
      _
    $region7: #{tpu_custom_call.1} parent=1 // pred_check_branch
      %23 = sbr.rel (0) target = $region9
    $region8: #{tpu_custom_call.1} parent=1 // pred_region
      %25 = vsyncadd [#allocation6], 0
      %s26 = sshll.u32 %s1, 4
      %s27 = int_to_ptr.hbm [resolvable:$true] %s26
      %s28 = sshll.u32 [#allocation5], 4
      %s29 = int_to_ptr.vmem [resolvable:$true] %s28
      %34 = dma.hbm_to_vmem [thread:$0]  %s27, 512, %s29, [#allocation6], 128, 128, 8
    $region9: #{tpu_custom_call.1} parent=1 // pred_fallthru
      _
    // Predicated region
    $region10: #{tpu_custom_call.1} parent=1 // pred_check
      _
    $region11: #{tpu_custom_call.1} parent=1 // pred_check_branch
      %36 = sbr.rel (0) target = $region13
    $region12: #{tpu_custom_call.1} parent=1 // pred_region
      _
    $region13: #{tpu_custom_call.1} parent=1 // pred_fallthru
      _
    // Predicated region
    $region14: #{tpu_custom_call.1} parent=1 // pred_check
      _
    $region15: #{tpu_custom_call.1} parent=1 // pred_check_branch
      %38 = sbr.rel (0) target = $region17
    $region16: #{tpu_custom_call.1} parent=1 // pred_region
      %40 = dma.done [#allocation3], 128
    $region17: #{tpu_custom_call.1} parent=1 // pred_fallthru
      _
    // Predicated region
    $region18: #{tpu_custom_call.1} parent=1 // pred_check
      _
    $region19: #{tpu_custom_call.1} parent=1 // pred_check_branch
      %42 = sbr.rel (0) target = $region21
    $region20: #{tpu_custom_call.1} parent=1 // pred_region
      %44 = dma.done [#allocation6], 512
    $region21: #{tpu_custom_call.1} parent=1 // pred_fallthru
      _
    %v45 = vld [vmem:[#allocation2] sm:$0xff]
    %v46 = vld [vmem:[#allocation5] sm:$0xff]
    %v47 = vld [vmem:[#allocation5 + $0x8] sm:$0xff]
    %v48 = vld [vmem:[#allocation5 + $0x10] sm:$0xff]
    %v49 = vld [vmem:[#allocation5 + $0x18] sm:$0xff]
    %v50 = vld [vmem:[%s2] sm:$0x1]
    %v52 = vperm.slane %v50, 0
    %vm54 = vcmask 261120
    %v56 = vsel %vm54, %v45, 0
    %58 = vmatpush.msra.mxu0 0.0
    %59 = vmatpush.msra.mxu0 0.0
    %60 = vmatpush.msra.mxu0 0.0
    %61 = vmatpush.msra.mxu0 0.0
    %62 = vmatpush.msra.mxu0 0.0
    %63 = vmatpush.msra.mxu0 0.0
    %64 = vmatpush.msra.mxu0 0.0
    %65 = vmatpush.msra.mxu0 0.0
    %66 = vmatpush.msra.mxu0 0.0
    %67 = vmatpush.msra.mxu0 0.0
    %68 = vmatpush.msra.mxu0 0.0
    %69 = vmatpush.msra.mxu0 0.0
    %70 = vmatpush.msra.mxu0 %v49
    %71 = vmatpush.msra.mxu0 %v48
    %72 = vmatpush.msra.mxu0 %v47
    %73 = vmatpush.msra.mxu0 %v46
    %74 = vmatmul.f32.gmra.mxu0 %v56
    %v75 = vpop.f32.mrf.mxu0
    %v76 = vadd.f32 %v52, %v75
    %77 = vdwg.mxu0
    %v78 = vmax.f32 %v76, 0.0
    %v80 = vsel %vm54, 1.0, 0
    %v83 = vsel %vm54, %v78, 0
    %85 = vmatpush.xpose.msra.mxu0 0.0
    %86 = vmatpush.xpose.msra.mxu0 0.0
    %87 = vmatpush.xpose.msra.mxu0 0.0
    %88 = vmatpush.xpose.msra.mxu0 0.0
    %89 = vmatpush.xpose.msra.mxu0 0.0
    %90 = vmatpush.xpose.msra.mxu0 0.0
    %91 = vmatpush.xpose.msra.mxu0 0.0
    %92 = vmatpush.xpose.msra.mxu0 0.0
    %93 = vmatpush.xpose.msra.mxu0 0.0
    %94 = vmatpush.xpose.msra.mxu0 0.0
    %95 = vmatpush.xpose.msra.mxu0 0.0
    %96 = vmatpush.xpose.msra.mxu0 0.0
    %97 = vmatpush.xpose.msra.mxu0 0.0
    %98 = vmatpush.xpose.msra.mxu0 0.0
    %99 = vmatpush.xpose.msra.mxu0 0.0
    %100 = vmatpush.xpose.msra.mxu0 %v83
    %101 = vmatmul.f32.gmra.mxu0 %v80
    %v102 = vpop.f32.mrf.mxu0
    %v103 = vadd.f32 0.0, %v102
    %104 = vdwg.mxu0
    %v105 = vmax.f32 %v103, 1e-12
    %v106 = vrcp.pop %v105
    %v107 = vmul.f32 %v105, %v106
    %v108 = vsub.f32 1.0, %v107
    %v109 = vmul.f32 %v106, %v108
    %v110 = vadd.f32 %v106, %v109
    %vm111 = vweird.f32 %v105
    %vm112 = vweird.f32 %v106
    %vm113 = vmor %vm111, %vm112
    %v114 = vsel %vm113, %v106, %v110
    %v115 = vand.u32 2147483647, %v105
    %vm116 = vcmp.eq.f32.partialorder %v115, 8.507059e+37
    %v117 = vand.u32 %v105, 2147483648
    %v118 = vor.u32 1.1754944e-38, %v117
    %v119 = vsel %vm116, %v118, %v114
    %v120 = vmul.f32 %v103, %v119
    %vm121 = vcmask 57344
    %122 = vst.msk [vmem:[#allocation7] sm:$0x1] %vm121, %v120
    // Predicated region
    $region22: #{tpu_custom_call.1} parent=1 // pred_check
      _
    $region23: #{tpu_custom_call.1} parent=1 // pred_check_branch
      %124 = sbr.rel (0) target = $region25
    $region24: #{tpu_custom_call.1} parent=1 // pred_region
      %126 = vsyncadd [#allocation4], 0
      %s128 = sshll.u32 [#allocation7], 4
      %s129 = int_to_ptr.vmem [resolvable:$true] %s128
      %s130 = sshll.u32 %s3, 4
      %s131 = int_to_ptr.hbm [resolvable:$true] %s130
      %133 = dma.vmem_to_hbm [thread:$0]  %s129, 16, %s131, [#allocation4]
    $region25: #{tpu_custom_call.1} parent=1 // pred_fallthru
      _
    // Predicated region
    $region26: #{tpu_custom_call.1} parent=1 // pred_check
      _
    $region27: #{tpu_custom_call.1} parent=1 // pred_check_branch
      %135 = sbr.rel (0) target = $region29
    $region28: #{tpu_custom_call.1} parent=1 // pred_region
      %137 = dma.done [#allocation4], 16
    $region29: #{tpu_custom_call.1} parent=1 // pred_fallthru
      _
    %138 = vsyncpa [#allocation3], 1
    %139 = vsyncpa [#allocation6], 1
    %140 = vsyncpa [#allocation4], 1

</llo_original>
